<compile_context>
chip_gen: v7x
topology: tpu7x:2x2x1
jax: 0.10.0
libtpu: 0.0.40
codegen_flags: <defaults>
</compile_context>

<pallas_src>
import math

import jax
import jax.numpy as jnp
from jax.experimental import pallas as pl
from jax.experimental.pallas import tpu as pltpu


# ----------------------------------------------------------------------------
# Kernel
# ----------------------------------------------------------------------------
def _make_encoder_kernel(num_lin_layers, matmul_dtype):
    """Fused Encoder forward for one row tile.

    y_mlp + residual + bias are pre-folded into the first Linear (wrapper side):
        h0 = cx @ W0 + cy @ Wy' + b0'
    then the remaining Linear(+ReLU) chain runs on the MXU with f32 accumulation.
    """

    def kernel(cx_ref, cy_ref, *refs):
        # refs = (w0, wy', b0', w_1, b_1, ..., w_{L-1}, b_{L-1}, out_ref)
        out_ref = refs[-1]
        w0_ref, wy_ref, b0_ref = refs[0], refs[1], refs[2]

        # First (folded) layer: two MXU pushes into one f32 accumulator.
        x = (jnp.dot(cx_ref[...], w0_ref[...], preferred_element_type=jnp.float32)
             + jnp.dot(cy_ref[...], wy_ref[...], preferred_element_type=jnp.float32)
             + b0_ref[...])
        if num_lin_layers > 1:
            x = jnp.maximum(x, 0.0)                       # f32 on the VPU

        idx = 3
        for layer in range(1, num_lin_layers):
            w_ref, b_ref = refs[idx], refs[idx + 1]
            idx += 2
            x = jnp.dot(x.astype(matmul_dtype), w_ref[...],
                        preferred_element_type=jnp.float32) + b_ref[...]
            if layer < num_lin_layers - 1:
                x = jnp.maximum(x, 0.0)

        out_ref[...] = x.astype(out_ref.dtype)

    return kernel


# ----------------------------------------------------------------------------
# Wrapper
# ----------------------------------------------------------------------------
def encoder_forward(context_x, context_y, params, *, tm=1024,
                    io_dtype=jnp.bfloat16, matmul_dtype=jnp.bfloat16):
    """context_x: (..., x_dims), context_y: (..., y_dims).  Leading dims (tasks,
    context points) are folded into a single row axis and tiled by `tm` rows.
    Activations / output travel HBM<->VMEM in `io_dtype` (kernel is mem-bound)."""
    wy, by = params["wy"], params["by"]
    ws, bs = params["ws"], params["bs"]
    num_lin = len(ws)
    assert num_lin >= 1

    x_dims = context_x.shape[-1]
    y_dims = context_y.shape[-1]
    rep_dim = ws[-1].shape[1]
    lead_shape = context_x.shape[:-1]

    cx = context_x.reshape(-1, x_dims).astype(io_dtype)
    cy = context_y.reshape(-1, y_dims).astype(io_dtype)
    M = cx.shape[0]

    # Row tile: multiple of 8, and capped so we keep >= 2 grid steps when the
    # row count allows it (v7x megacore needs >= 2 "parallel" steps).
    tm = max(8, ((int(tm) + 7) // 8) * 8)
    rows8 = max(8, pl.cdiv(M, 8) * 8)
    if rows8 >= 16:
        tm = min(tm, max(8, ((pl.cdiv(M, 2) + 7) // 8) * 8))
    else:
        tm = rows8
    m_pad = pl.cdiv(M, tm) * tm
    if m_pad != M:
        cx = jnp.pad(cx, ((0, m_pad - M), (0, 0)))
        cy = jnp.pad(cy, ((0, m_pad - M), (0, 0)))

    # Fold y_mlp + residual + bias into the first Linear (exact algebra, f32,
    # then cast MXU operands to matmul_dtype).
    w0f = jnp.asarray(ws[0], jnp.float32)
    wyp = (jnp.asarray(wy, jnp.float32) @ w0f)                       # (y_dims, h0)
    b0p = jnp.asarray(bs[0], jnp.float32) + jnp.asarray(by, jnp.float32) @ w0f

    flat_params = [w0f.astype(matmul_dtype), wyp.astype(matmul_dtype),
                   b0p.astype(jnp.float32)]
    for w, b in zip(ws[1:], bs[1:]):
        flat_params.extend([w.astype(matmul_dtype), b.astype(jnp.float32)])

    def row_spec(d):
        return pl.BlockSpec((tm, d), lambda i: (i, 0))

    def const_spec(shape):
        return pl.BlockSpec(shape, lambda i: tuple(0 for _ in shape))

    in_specs = [row_spec(x_dims), row_spec(y_dims)]
    in_specs += [const_spec(p.shape) for p in flat_params]

    # Right-sized VMEM budget: double-buffered io tiles + resident weights +
    # f32 intermediates headroom.
    io_bytes = jnp.dtype(io_dtype).itemsize
    tile_bytes = tm * (x_dims + y_dims + rep_dim) * io_bytes
    weight_bytes = sum(int(p.size) * p.dtype.itemsize for p in flat_params)
    max_w = max([x_dims, rep_dim] + [w.shape[1] for w in ws])
    vmem_limit = max(4 << 20,
                     2 * tile_bytes + weight_bytes + 4 * tm * max_w * 4 + (2 << 20))

    # Advisory cost estimate for XLA's scheduler.
    flops = 2 * m_pad * (y_dims + x_dims) * ws[0].shape[1]
    bytes_accessed = (cx.size + cy.size + m_pad * rep_dim) * io_bytes
    bytes_accessed += weight_bytes
    for w in ws[1:]:
        flops += 2 * m_pad * w.shape[0] * w.shape[1]

    out = pl.pallas_call(
        _make_encoder_kernel(num_lin, matmul_dtype),
        out_shape=jax.ShapeDtypeStruct((m_pad, rep_dim), io_dtype),
        grid=(m_pad // tm,),
        in_specs=in_specs,
        out_specs=row_spec(rep_dim),
        compiler_params=pltpu.CompilerParams(
            dimension_semantics=("parallel",),        # megacore sharding on v7x
            vmem_limit_bytes=int(vmem_limit)),
        cost_estimate=pl.CostEstimate(
            flops=flops, transcendentals=0, bytes_accessed=int(bytes_accessed)),
    )(cx, cy, *flat_params)

    out = out[:M]
    # Final .view(out_shape[:-1] + [-1]) in the PyTorch code is an identity reshape.
    return out.reshape(lead_shape + (rep_dim,))


# ----------------------------------------------------------------------------
# Params + references
# ----------------------------------------------------------------------------
def init_params(key, sizes, x_dims, y_dims):
    """Deterministic PyTorch-nn.Linear-style init (uniform +/- 1/sqrt(fan_in)).
    Weights stored as (in_features, out_features) so kernels compute x @ W + b."""

    def linear(key, fan_in, fan_out):
        k_w, k_b = jax.random.split(key)
        bound = 1.0 / math.sqrt(fan_in)
        w = jax.random.uniform(k_w, (fan_in, fan_out), jnp.float32, -bound, bound)
        b = jax.random.uniform(k_b, (1, fan_out), jnp.float32, -bound, bound)
        return w, b

    keys = jax.random.split(key, 1 + (len(sizes) - 1))
    wy, by = linear(keys[0], y_dims, x_dims)
    ws, bs = [], []
    for i in range(len(sizes) - 1):
        w, b = linear(keys[1 + i], sizes[i], sizes[i + 1])
        ws.append(w)
        bs.append(b)
    return {"wy": wy, "by": by, "ws": ws, "bs": bs}


def reference_forward(context_x, context_y, params):
    """Plain-JAX f32 reference matching the PyTorch module math exactly."""
    wy, by = params["wy"], params["by"]
    x = context_x + (context_y @ wy + by)
    n = len(params["ws"])
    for i, (w, b) in enumerate(zip(params["ws"], params["bs"])):
        x = x @ w + b
        if i < n - 1:
            x = jnp.maximum(x, 0.0)
    return x


def reference_forward_mirrored(context_x, context_y, params,
                               io_dtype=jnp.bfloat16, matmul_dtype=jnp.bfloat16):
    """Reference that mirrors the kernel's numerics (bf16 I/O, folded first layer,
    bf16 matmul operands, f32 accumulation, f32 elementwise)."""
    wy, by = params["wy"], params["by"]
    ws, bs = params["ws"], params["bs"]
    n = len(ws)
    w0f = jnp.asarray(ws[0], jnp.float32)
    wyp = (jnp.asarray(wy, jnp.float32) @ w0f).astype(matmul_dtype)
    b0p = jnp.asarray(bs[0], jnp.float32) + jnp.asarray(by, jnp.float32) @ w0f
    cx = context_x.astype(io_dtype)
    cy = context_y.astype(io_dtype)
    x = (jnp.dot(cx, w0f.astype(matmul_dtype), preferred_element_type=jnp.float32)
         + jnp.dot(cy, wyp, preferred_element_type=jnp.float32) + b0p)
    if n > 1:
        x = jnp.maximum(x, 0.0)
    for i in range(1, n):
        x = jnp.dot(x.astype(matmul_dtype), ws[i].astype(matmul_dtype),
                    preferred_element_type=jnp.float32) + bs[i]
        if i < n - 1:
            x = jnp.maximum(x, 0.0)
    return x.astype(io_dtype)


# ----------------------------------------------------------------------------
# Demo / self-check
# ----------------------------------------------------------------------------
if __name__ == "__main__":
    # Batched CNP tasks folded into the row axis: B tasks x N context points.
    B, N = 4, 128                 # 512 rows -> two row tiles (megacore-friendly)
    x_dims, y_dims = 32, 2
    sizes = [x_dims, 64, 32]      # linears MLP layer sizes (first must equal x_dims)

    key = jax.random.PRNGKey(0)
    k_params, k_x, k_y = jax.random.split(key, 3)

    params = init_params(k_params, sizes, x_dims, y_dims)
    context_x = jax.random.normal(k_x, (B, N, x_dims), jnp.float32)
    context_y = jax.random.normal(k_y, (B, N, y_dims), jnp.float32)

    out = encoder_forward(context_x, context_y, params)
    out = jax.block_until_ready(out)
    assert out.shape == (B, N, sizes[-1]), out.shape

    out_f32 = out.astype(jnp.float32)

    # Tight check vs a reference that mirrors the kernel's bf16 numerics.
    ref_m = reference_forward_mirrored(context_x, context_y, params).astype(jnp.float32)
    assert jnp.allclose(out_f32, ref_m, atol=5e-2, rtol=2e-2), \
        float(jnp.max(jnp.abs(out_f32 - ref_m)))

    # Loose sanity check vs the full-f32 PyTorch-exact reference.
    ref_f32 = reference_forward(context_x, context_y, params)
    assert jnp.allclose(out_f32, ref_f32, atol=2.5e-1, rtol=1e-1), \
        float(jnp.max(jnp.abs(out_f32 - ref_f32)))

    print("KERNEL_OK")
</pallas_src>

<mosaic_0001>
module attributes {stable_mosaic.version = 11 : i64} {
  func.func @kernel(%arg0: i32, %arg1: memref<256x32xbf16, #tpu.memory_space<vmem>>, %arg2: memref<256x2xbf16, #tpu.memory_space<vmem>>, %arg3: memref<32x64xbf16, #tpu.memory_space<vmem>>, %arg4: memref<2x64xbf16, #tpu.memory_space<vmem>>, %arg5: memref<1x64xf32, #tpu.memory_space<vmem>>, %arg6: memref<64x32xbf16, #tpu.memory_space<vmem>>, %arg7: memref<1x32xf32, #tpu.memory_space<vmem>>, %arg8: memref<256x32xbf16, #tpu.memory_space<vmem>>) attributes {dimension_semantics = [#tpu.dimension_semantics<parallel>], iteration_bounds = array<i64: 2>, scalar_prefetch = 0 : i64, scratch_operands = 0 : i64, tpu.core_type = #tpu.core_type<tc>, window_params = [{transform_indices = @transform_0, window_bounds = array<i64: 256, 32>}, {transform_indices = @transform_1, window_bounds = array<i64: 256, 2>}, {pipeline_mode = #tpu.pipeline_mode<synchronous>, transform_indices = @transform_2, window_bounds = array<i64: 32, 64>}, {pipeline_mode = #tpu.pipeline_mode<synchronous>, transform_indices = @transform_3, window_bounds = array<i64: 2, 64>}, {pipeline_mode = #tpu.pipeline_mode<synchronous>, transform_indices = @transform_4, window_bounds = array<i64: 1, 64>}, {pipeline_mode = #tpu.pipeline_mode<synchronous>, transform_indices = @transform_5, window_bounds = array<i64: 64, 32>}, {pipeline_mode = #tpu.pipeline_mode<synchronous>, transform_indices = @transform_6, window_bounds = array<i64: 1, 32>}, {transform_indices = @transform_7, window_bounds = array<i64: 256, 32>}]} {
    %c0 = arith.constant 0 : index
    %c0_0 = arith.constant 0 : index
    %0 = vector.load %arg1[%c0, %c0_0] : memref<256x32xbf16, #tpu.memory_space<vmem>>, vector<256x32xbf16>
    %c0_1 = arith.constant 0 : index
    %c0_2 = arith.constant 0 : index
    %1 = vector.load %arg3[%c0_1, %c0_2] : memref<32x64xbf16, #tpu.memory_space<vmem>>, vector<32x64xbf16>
    %cst = arith.constant dense<0.000000e+00> : vector<256x64xf32>
    %2 = tpu.matmul %0, %1, %cst {dimension_numbers = #tpu.dot_dimension_numbers<[1], [0], [0], [1], [0, 0, 1, 1], [], []>} : vector<256x32xbf16>, vector<32x64xbf16>, vector<256x64xf32> -> vector<256x64xf32>
    %c0_3 = arith.constant 0 : index
    %c0_4 = arith.constant 0 : index
    %3 = vector.load %arg2[%c0_3, %c0_4] : memref<256x2xbf16, #tpu.memory_space<vmem>>, vector<256x2xbf16>
    %c0_5 = arith.constant 0 : index
    %c0_6 = arith.constant 0 : index
    %4 = vector.load %arg4[%c0_5, %c0_6] : memref<2x64xbf16, #tpu.memory_space<vmem>>, vector<2x64xbf16>
    %cst_7 = arith.constant dense<0.000000e+00> : vector<256x64xf32>
    %5 = tpu.matmul %3, %4, %cst_7 {dimension_numbers = #tpu.dot_dimension_numbers<[1], [0], [0], [1], [0, 0, 1, 1], [], []>} : vector<256x2xbf16>, vector<2x64xbf16>, vector<256x64xf32> -> vector<256x64xf32>
    %6 = arith.addf %2, %5 : vector<256x64xf32>
    %c0_8 = arith.constant 0 : index
    %c0_9 = arith.constant 0 : index
    %7 = vector.load %arg5[%c0_8, %c0_9] : memref<1x64xf32, #tpu.memory_space<vmem>>, vector<1x64xf32>
    %8 = vector.broadcast %7 : vector<1x64xf32> to vector<256x64xf32>
    %9 = arith.addf %6, %8 : vector<256x64xf32>
    %cst_10 = arith.constant 0.000000e+00 : f32
    %10 = vector.broadcast %cst_10 : f32 to vector<256x64xf32>
    %11 = arith.maximumf %9, %10 : vector<256x64xf32>
    %12 = arith.truncf %11 : vector<256x64xf32> to vector<256x64xbf16>
    %c0_11 = arith.constant 0 : index
    %c0_12 = arith.constant 0 : index
    %13 = vector.load %arg6[%c0_11, %c0_12] : memref<64x32xbf16, #tpu.memory_space<vmem>>, vector<64x32xbf16>
    %cst_13 = arith.constant dense<0.000000e+00> : vector<256x32xf32>
    %14 = tpu.matmul %12, %13, %cst_13 {dimension_numbers = #tpu.dot_dimension_numbers<[1], [0], [0], [1], [0, 0, 1, 1], [], []>} : vector<256x64xbf16>, vector<64x32xbf16>, vector<256x32xf32> -> vector<256x32xf32>
    %c0_14 = arith.constant 0 : index
    %c0_15 = arith.constant 0 : index
    %15 = vector.load %arg7[%c0_14, %c0_15] : memref<1x32xf32, #tpu.memory_space<vmem>>, vector<1x32xf32>
    %16 = vector.broadcast %15 : vector<1x32xf32> to vector<256x32xf32>
    %17 = arith.addf %14, %16 : vector<256x32xf32>
    %18 = arith.truncf %17 : vector<256x32xf32> to vector<256x32xbf16>
    %c0_16 = arith.constant 0 : index
    %c0_17 = arith.constant 0 : index
    %19 = vector.load %arg8[%c0_16, %c0_17] : memref<256x32xbf16, #tpu.memory_space<vmem>>, vector<256x32xbf16>
    tpu.vector_store %arg8[%c0_16, %c0_17], %18 {strides = array<i32>} : memref<256x32xbf16, #tpu.memory_space<vmem>>, vector<256x32xbf16>,
    return
  }
  func.func @transform_0(%arg0: i32) -> (i32, i32) {
    %c0_i32 = arith.constant 0 : i32
    %c0_i32_0 = arith.constant 0 : i32
    return %arg0, %c0_i32 : i32, i32
  }
  func.func @transform_1(%arg0: i32) -> (i32, i32) {
    %c0_i32 = arith.constant 0 : i32
    %c0_i32_0 = arith.constant 0 : i32
    return %arg0, %c0_i32 : i32, i32
  }
  func.func @transform_2(%arg0: i32) -> (i32, i32) {
    %c0_i32 = arith.constant 0 : i32
    %c0_i32_0 = arith.constant 0 : i32
    %c0_i32_1 = arith.constant 0 : i32
    return %c0_i32, %c0_i32_0 : i32, i32
  }
  func.func @transform_3(%arg0: i32) -> (i32, i32) {
    %c0_i32 = arith.constant 0 : i32
    %c0_i32_0 = arith.constant 0 : i32
    %c0_i32_1 = arith.constant 0 : i32
    return %c0_i32, %c0_i32_0 : i32, i32
  }
  func.func @transform_4(%arg0: i32) -> (i32, i32) {
    %c0_i32 = arith.constant 0 : i32
    %c0_i32_0 = arith.constant 0 : i32
    %c0_i32_1 = arith.constant 0 : i32
    return %c0_i32, %c0_i32_0 : i32, i32
  }
  func.func @transform_5(%arg0: i32) -> (i32, i32) {
    %c0_i32 = arith.constant 0 : i32
    %c0_i32_0 = arith.constant 0 : i32
    %c0_i32_1 = arith.constant 0 : i32
    return %c0_i32, %c0_i32_0 : i32, i32
  }
  func.func @transform_6(%arg0: i32) -> (i32, i32) {
    %c0_i32 = arith.constant 0 : i32
    %c0_i32_0 = arith.constant 0 : i32
    %c0_i32_1 = arith.constant 0 : i32
    return %c0_i32, %c0_i32_0 : i32, i32
  }
  func.func @transform_7(%arg0: i32) -> (i32, i32) {
    %c0_i32 = arith.constant 0 : i32
    %c0_i32_0 = arith.constant 0 : i32
    return %arg0, %c0_i32 : i32, i32
  }
}

</mosaic_0001>

<llo_original>
// kernel: tpu_custom_call.1
$region0: #{tpu_custom_call.1}
  #allocation0 [shape = 'u32[]', space=smem, size = 0x4, offset = 0x4, fixed_abs, tag = 'smem constant byte address 0x4 - core index']
  #allocation1 [shape = 'u32[144,128]{1,0:T(1,128)}', space=vmem, size = 0x12000, scoped, tag = 'internal scratch']
  %s0 = inlined_call_operand.vmem [shape: bf16[512,32], index: 0, kind: input, shape index: {}]
  %s1 = inlined_call_operand.vmem [shape: bf16[512,2], index: 1, kind: input, shape index: {}]
  %s2 = inlined_call_operand.vmem [shape: bf16[32,64], index: 2, kind: input, shape index: {}]
  %s3 = inlined_call_operand.vmem [shape: bf16[2,64], index: 3, kind: input, shape index: {}]
  %s4 = inlined_call_operand.vmem [shape: f32[1,64], index: 4, kind: input, shape index: {}]
  %s5 = inlined_call_operand.vmem [shape: bf16[64,32], index: 5, kind: input, shape index: {}]
  %s6 = inlined_call_operand.vmem [shape: f32[1,32], index: 6, kind: input, shape index: {}]
  %s7 = inlined_call_operand.vmem [shape: bf16[512,32], index: 7, kind: output, shape index: {}]
  %s8 = sld [smem:[#allocation0]]
  $region61: #{tpu_custom_call.1} parent=0
    _
  %s10 = ssub.s32 1, %s8
  %s11 = scalar_select 0, %s10, %s8
  loop: start=0, step=1, limit=4
  $region2: #{tpu_custom_call.1} parent=0 // loop_pre_header
    _
  $region3: #{tpu_custom_call.1} parent=0 // loop_header
    %s13 = sphi 0, %s17
    %p14 = scmp.ge.s32.totalorder %s13, 4
    %s23 = sphi 0, %s25
    %s26 = sphi 0, %s23
    %s27 = sphi 0, %s26
    %s43 = sphi 0, %s27
    %s49 = sphi 0, %s51
    %s52 = sphi 0, %s49
    %s53 = sphi 0, %s52
    %s69 = sphi 0, %s53
    %s73 = sphi 0, %s73
    %s75 = sphi 0, %s73
    %s76 = sphi 0, %s75
    %s90 = sphi 0, %s76
    %s94 = sphi 0, %s94
    %s96 = sphi 0, %s94
    %s97 = sphi 0, %s96
    %s111 = sphi 0, %s97
    %s115 = sphi 0, %s115
    %s117 = sphi 0, %s115
    %s118 = sphi 0, %s117
    %s132 = sphi 0, %s118
    %s136 = sphi 0, %s136
    %s138 = sphi 0, %s136
    %s139 = sphi 0, %s138
    %s153 = sphi 0, %s139
    %s157 = sphi 0, %s157
    %s159 = sphi 0, %s157
    %s160 = sphi 0, %s159
    %s174 = sphi 0, %s160
    %s180 = sphi 0, %s182
    %s183 = sphi 0, %s180
    %s184 = sphi 0, %s183
    %s200 = sphi 0, %s184
  $region4: #{tpu_custom_call.1} parent=0 // loop_header_branch
    %16 = sbr.rel (%p14) target = $region8
  $region5: #{tpu_custom_call.1} parent=0 // loop_body
    %s18 = ssub.s32 %s13, 1
    %s19 = ssub.s32 %s13, 2
    %s20 = sadd.s32 %s13, 1
    %s21 = ssub.s32 %s13, %s20
    %p22 = scmp.eq.s32.totalorder %s21, 0
    %s24 = sadd.s32 %s23, 1
    %s25 = scalar_select %p22, %s23, %s24
    %p28 = pneg %p22
    %p29 = scmp.eq.s32.totalorder %s13, 1
    %p30 = por %p28, %p29
    %p31 = scmp.ne.s32.totalorder %s23, %s26
    %p32 = scmp.eq.s32.totalorder %s13, 0
    %p33 = por %p31, %p32
    %p34 = scmp.ne.s32.totalorder %s23, %s26
    %p35 = scmp.eq.s32.totalorder %s18, 1
    %p36 = por %p34, %p35
    %p37 = scmp.ne.s32.totalorder %s26, %s27
    %p38 = scmp.eq.s32.totalorder %s18, 0
    %p39 = por %p37, %p38
    %p40 = scmp.ne.s32.totalorder %s26, %s27
    %p41 = scmp.eq.s32.totalorder %s19, 1
    %p42 = por %p40, %p41
    %p44 = scmp.ne.s32.totalorder %s27, %s43
    %p45 = scmp.eq.s32.totalorder %s19, 0
    %p46 = por %p44, %p45
    %s47 = ssub.s32 %s13, %s20
    %p48 = scmp.eq.s32.totalorder %s47, 0
    %s50 = sadd.s32 %s49, 1
    %s51 = scalar_select %p48, %s49, %s50
    %p54 = pneg %p48
    %p55 = scmp.eq.s32.totalorder %s13, 1
    %p56 = por %p54, %p55
    %p57 = scmp.ne.s32.totalorder %s49, %s52
    %p58 = scmp.eq.s32.totalorder %s13, 0
    %p59 = por %p57, %p58
    %p60 = scmp.ne.s32.totalorder %s49, %s52
    %p61 = scmp.eq.s32.totalorder %s18, 1
    %p62 = por %p60, %p61
    %p63 = scmp.ne.s32.totalorder %s52, %s53
    %p64 = scmp.eq.s32.totalorder %s18, 0
    %p65 = por %p63, %p64
    %p66 = scmp.ne.s32.totalorder %s52, %s53
    %p67 = scmp.eq.s32.totalorder %s19, 1
    %p68 = por %p66, %p67
    %p70 = scmp.ne.s32.totalorder %s53, %s69
    %p71 = scmp.eq.s32.totalorder %s19, 0
    %p72 = por %p70, %p71
    %s74 = sadd.s32 %s73, 1
    %p77 = scmp.eq.s32.totalorder %s13, 1
    %p78 = scmp.ne.s32.totalorder %s73, %s75
    %p79 = scmp.eq.s32.totalorder %s13, 0
    %p80 = por %p78, %p79
    %p81 = scmp.ne.s32.totalorder %s73, %s75
    %p82 = scmp.eq.s32.totalorder %s18, 1
    %p83 = por %p81, %p82
    %p84 = scmp.ne.s32.totalorder %s75, %s76
    %p85 = scmp.eq.s32.totalorder %s18, 0
    %p86 = por %p84, %p85
    %p87 = scmp.ne.s32.totalorder %s75, %s76
    %p88 = scmp.eq.s32.totalorder %s19, 1
    %p89 = por %p87, %p88
    %p91 = scmp.ne.s32.totalorder %s76, %s90
    %p92 = scmp.eq.s32.totalorder %s19, 0
    %p93 = por %p91, %p92
    %s95 = sadd.s32 %s94, 1
    %p98 = scmp.eq.s32.totalorder %s13, 1
    %p99 = scmp.ne.s32.totalorder %s94, %s96
    %p100 = scmp.eq.s32.totalorder %s13, 0
    %p101 = por %p99, %p100
    %p102 = scmp.ne.s32.totalorder %s94, %s96
    %p103 = scmp.eq.s32.totalorder %s18, 1
    %p104 = por %p102, %p103
    %p105 = scmp.ne.s32.totalorder %s96, %s97
    %p106 = scmp.eq.s32.totalorder %s18, 0
    %p107 = por %p105, %p106
    %p108 = scmp.ne.s32.totalorder %s96, %s97
    %p109 = scmp.eq.s32.totalorder %s19, 1
    %p110 = por %p108, %p109
    %p112 = scmp.ne.s32.totalorder %s97, %s111
    %p113 = scmp.eq.s32.totalorder %s19, 0
    %p114 = por %p112, %p113
    %s116 = sadd.s32 %s115, 1
    %p119 = scmp.eq.s32.totalorder %s13, 1
    %p120 = scmp.ne.s32.totalorder %s115, %s117
    %p121 = scmp.eq.s32.totalorder %s13, 0
    %p122 = por %p120, %p121
    %p123 = scmp.ne.s32.totalorder %s115, %s117
    %p124 = scmp.eq.s32.totalorder %s18, 1
    %p125 = por %p123, %p124
    %p126 = scmp.ne.s32.totalorder %s117, %s118
    %p127 = scmp.eq.s32.totalorder %s18, 0
    %p128 = por %p126, %p127
    %p129 = scmp.ne.s32.totalorder %s117, %s118
    %p130 = scmp.eq.s32.totalorder %s19, 1
    %p131 = por %p129, %p130
    %p133 = scmp.ne.s32.totalorder %s118, %s132
    %p134 = scmp.eq.s32.totalorder %s19, 0
    %p135 = por %p133, %p134
    %s137 = sadd.s32 %s136, 1
    %p140 = scmp.eq.s32.totalorder %s13, 1
    %p141 = scmp.ne.s32.totalorder %s136, %s138
    %p142 = scmp.eq.s32.totalorder %s13, 0
    %p143 = por %p141, %p142
    %p144 = scmp.ne.s32.totalorder %s136, %s138
    %p145 = scmp.eq.s32.totalorder %s18, 1
    %p146 = por %p144, %p145
    %p147 = scmp.ne.s32.totalorder %s138, %s139
    %p148 = scmp.eq.s32.totalorder %s18, 0
    %p149 = por %p147, %p148
    %p150 = scmp.ne.s32.totalorder %s138, %s139
    %p151 = scmp.eq.s32.totalorder %s19, 1
    %p152 = por %p150, %p151
    %p154 = scmp.ne.s32.totalorder %s139, %s153
    %p155 = scmp.eq.s32.totalorder %s19, 0
    %p156 = por %p154, %p155
    %s158 = sadd.s32 %s157, 1
    %p161 = scmp.eq.s32.totalorder %s13, 1
    %p162 = scmp.ne.s32.totalorder %s157, %s159
    %p163 = scmp.eq.s32.totalorder %s13, 0
    %p164 = por %p162, %p163
    %p165 = scmp.ne.s32.totalorder %s157, %s159
    %p166 = scmp.eq.s32.totalorder %s18, 1
    %p167 = por %p165, %p166
    %p168 = scmp.ne.s32.totalorder %s159, %s160
    %p169 = scmp.eq.s32.totalorder %s18, 0
    %p170 = por %p168, %p169
    %p171 = scmp.ne.s32.totalorder %s159, %s160
    %p172 = scmp.eq.s32.totalorder %s19, 1
    %p173 = por %p171, %p172
    %p175 = scmp.ne.s32.totalorder %s160, %s174
    %p176 = scmp.eq.s32.totalorder %s19, 0
    %p177 = por %p175, %p176
    %s178 = ssub.s32 %s13, %s20
    %p179 = scmp.eq.s32.totalorder %s178, 0
    %s181 = sadd.s32 %s180, 1
    %s182 = scalar_select %p179, %s180, %s181
    %p185 = pneg %p179
    %p186 = scmp.eq.s32.totalorder %s13, 1
    %p187 = por %p185, %p186
    %p188 = scmp.ne.s32.totalorder %s180, %s183
    %p189 = scmp.eq.s32.totalorder %s13, 0
    %p190 = por %p188, %p189
    %p191 = scmp.ne.s32.totalorder %s180, %s183
    %p192 = scmp.eq.s32.totalorder %s18, 1
    %p193 = por %p191, %p192
    %p194 = scmp.ne.s32.totalorder %s183, %s184
    %p195 = scmp.eq.s32.totalorder %s18, 0
    %p196 = por %p194, %p195
    %p197 = scmp.ne.s32.totalorder %s183, %s184
    %p198 = scmp.eq.s32.totalorder %s19, 1
    %p199 = por %p197, %p198
    %p201 = scmp.ne.s32.totalorder %s184, %s200
    %p202 = scmp.eq.s32.totalorder %s19, 0
    %p203 = por %p201, %p202
    %p204 = scmp.le.s32.totalorder 1, %s13
    %p205 = scmp.lt.s32.totalorder %s13, 3
    %p206 = pnand %p204, %p205
    %p207 = pneg %p206
    // Predicated region
    $region9: #{tpu_custom_call.1} parent=5 // pred_check
      _
    $region10: #{tpu_custom_call.1} parent=5 // pred_check_branch
      %209 = sbr.rel (%p206) target = $region12
    $region11: #{tpu_custom_call.1} parent=5 // pred_region
      %s210 = ssub.s32 %s13, 1
      // Predicated region
      $region13: #{tpu_custom_call.1} parent=11 // pred_check
        %p211 = pneg %p86
      $region14: #{tpu_custom_call.1} parent=11 // pred_check_branch
        %213 = sbr.rel (%p211) target = $region16
      $region15: #{tpu_custom_call.1} parent=11 // pred_region
        _
      $region16: #{tpu_custom_call.1} parent=11 // pred_fallthru
        _
      // Predicated region
      $region17: #{tpu_custom_call.1} parent=11 // pred_check
        %p214 = pneg %p107
      $region18: #{tpu_custom_call.1} parent=11 // pred_check_branch
        %216 = sbr.rel (%p214) target = $region20
      $region19: #{tpu_custom_call.1} parent=11 // pred_region
        _
      $region20: #{tpu_custom_call.1} parent=11 // pred_fallthru
        _
      // Predicated region
      $region21: #{tpu_custom_call.1} parent=11 // pred_check
        %p217 = pneg %p128
      $region22: #{tpu_custom_call.1} parent=11 // pred_check_branch
        %219 = sbr.rel (%p217) target = $region24
      $region23: #{tpu_custom_call.1} parent=11 // pred_region
        _
      $region24: #{tpu_custom_call.1} parent=11 // pred_fallthru
        _
      // Predicated region
      $region25: #{tpu_custom_call.1} parent=11 // pred_check
        %p220 = pneg %p149
      $region26: #{tpu_custom_call.1} parent=11 // pred_check_branch
        %222 = sbr.rel (%p220) target = $region28
      $region27: #{tpu_custom_call.1} parent=11 // pred_region
        _
      $region28: #{tpu_custom_call.1} parent=11 // pred_fallthru
        _
      // Predicated region
      $region29: #{tpu_custom_call.1} parent=11 // pred_check
        %p223 = pneg %p170
      $region30: #{tpu_custom_call.1} parent=11 // pred_check_branch
        %225 = sbr.rel (%p223) target = $region32
      $region31: #{tpu_custom_call.1} parent=11 // pred_region
        _
      $region32: #{tpu_custom_call.1} parent=11 // pred_fallthru
        _
    $region12: #{tpu_custom_call.1} parent=5 // pred_fallthru
      _
    %p226 = scmp.lt.s32.totalorder %s13, 2
    // Predicated region
    $region33: #{tpu_custom_call.1} parent=5 // pred_check
      %p227 = pneg %p226
    $region34: #{tpu_custom_call.1} parent=5 // pred_check_branch
      %229 = sbr.rel (%p227) target = $region36
    $region35: #{tpu_custom_call.1} parent=5 // pred_region
      // Predicated region
      $region37: #{tpu_custom_call.1} parent=35 // pred_check
        %p230 = pneg %p33
      $region38: #{tpu_custom_call.1} parent=35 // pred_check_branch
        %232 = sbr.rel (%p230) target = $region40
      $region39: #{tpu_custom_call.1} parent=35 // pred_region
        %s233 = smul.u32 32, %s13
        %p234 = scmp.lt.s32.totalorder %s233, 63
        %s235 = scalar_select %p234, %s233, 63
        %s236 = smul.addr %s235, 4
        %s237 = scalar_lea.vmem %s0, %s236
        %s238 = smul.u32 32, %s13
      $region40: #{tpu_custom_call.1} parent=35 // pred_fallthru
        _
      // Predicated region
      $region41: #{tpu_custom_call.1} parent=35 // pred_check
        %p239 = pneg %p59
      $region42: #{tpu_custom_call.1} parent=35 // pred_check_branch
        %241 = sbr.rel (%p239) target = $region44
      $region43: #{tpu_custom_call.1} parent=35 // pred_region
        %s242 = smul.u32 32, %s13
        %p243 = scmp.lt.s32.totalorder %s242, 63
        %s244 = scalar_select %p243, %s242, 63
        %s245 = smul.addr %s244, 4
        %s246 = scalar_lea.vmem %s1, %s245
        %s247 = smul.u32 32, %s13
      $region44: #{tpu_custom_call.1} parent=35 // pred_fallthru
        _
    $region36: #{tpu_custom_call.1} parent=5 // pred_fallthru
      _
    %p248 = scmp.le.s32.totalorder 1, %s13
    %p249 = scmp.lt.s32.totalorder %s13, 3
    %p250 = pnand %p248, %p249
    %p251 = pneg %p250
    // Predicated region
    $region45: #{tpu_custom_call.1} parent=5 // pred_check
      _
    $region46: #{tpu_custom_call.1} parent=5 // pred_check_branch
      %253 = sbr.rel (%p250) target = $region48
    $region47: #{tpu_custom_call.1} parent=5 // pred_region
      %s254 = ssub.s32 %s13, 1
      %s255 = smul.u32 32, %s18
      %p256 = scmp.lt.s32.totalorder %s255, 63
      %s257 = scalar_select %p256, %s255, 63
      %s258 = smul.addr %s257, 4
      %s259 = scalar_lea.vmem %s0, %s258
      %p260 = pneg %p39
      %p261 = pneg %p36
      %s262 = smul.u32 32, %s18
      %p263 = scmp.lt.s32.totalorder %s262, 63
      %s264 = scalar_select %p263, %s262, 63
      %s265 = smul.addr %s264, 4
      %s266 = scalar_lea.vmem %s1, %s265
      %p267 = pneg %p65
      %p268 = pneg %p62
      %p269 = pneg %p86
      %p270 = pneg %p83
      %p271 = pneg %p107
      %p272 = pneg %p104
      %p273 = pneg %p128
      %p274 = pneg %p125
      %p275 = pneg %p149
      %p276 = pneg %p146
      %p277 = pneg %p170
      %p278 = pneg %p167
      %p279 = pneg %p196
      %p280 = pneg %p193
      %s281 = smul.u32 32, %s18
      %p282 = scmp.lt.s32.totalorder %s281, 63
      %s283 = scalar_select %p282, %s281, 63
      %s284 = smul.addr %s283, 4
      %s285 = scalar_lea.vmem %s7, %s284
      %s286 = smul.u32 32, %s18
      %p287 = scmp.lt.s32.totalorder %s286, 63
      %s288 = scalar_select %p287, %s286, 63
      %s289 = smul.addr %s288, 4
      %s290 = scalar_lea.vmem %s0, %s289
      %s291 = smul.u32 32, %s18
      %s292 = smul.u32 32, %s18
      %p293 = scmp.lt.s32.totalorder %s292, 63
      %s294 = scalar_select %p293, %s292, 63
      %s295 = smul.addr %s294, 4
      %s296 = scalar_lea.vmem %s1, %s295
      %s297 = smul.u32 32, %s18
      %s298 = smul.u32 32, %s18
      %p299 = scmp.lt.s32.totalorder %s298, 63
      %s300 = scalar_select %p299, %s298, 63
      %s301 = smul.addr %s300, 4
      %s302 = scalar_lea.vmem %s7, %s301
      %s303 = smul.u32 32, %s18
      %v305 = vld [vmem:[%s290] sm:$0xf]
      %v306 = vld [vmem:[%s290 + $0x4] sm:$0xf]
      %v307 = vld [vmem:[%s290 + $0x8] sm:$0xf]
      %v308 = vld [vmem:[%s290 + $0xc] sm:$0xf]
      %v309 = vld [vmem:[%s290 + $0x10] sm:$0xf]
      %v310 = vld [vmem:[%s290 + $0x14] sm:$0xf]
      %v311 = vld [vmem:[%s290 + $0x18] sm:$0xf]
      %v312 = vld [vmem:[%s290 + $0x1c] sm:$0xf]
      %v313 = vld [vmem:[%s290 + $0x20] sm:$0xf]
      %v314 = vld [vmem:[%s290 + $0x24] sm:$0xf]
      %v315 = vld [vmem:[%s290 + $0x28] sm:$0xf]
      %v316 = vld [vmem:[%s290 + $0x2c] sm:$0xf]
      %v317 = vld [vmem:[%s290 + $0x30] sm:$0xf]
      %v318 = vld [vmem:[%s290 + $0x34] sm:$0xf]
      %v319 = vld [vmem:[%s290 + $0x38] sm:$0xf]
      %v320 = vld [vmem:[%s290 + $0x3c] sm:$0xf]
      %v321 = vld [vmem:[%s290 + $0x40] sm:$0xf]
      %v322 = vld [vmem:[%s290 + $0x44] sm:$0xf]
      %v323 = vld [vmem:[%s290 + $0x48] sm:$0xf]
      %v324 = vld [vmem:[%s290 + $0x4c] sm:$0xf]
      %v325 = vld [vmem:[%s290 + $0x50] sm:$0xf]
      %v326 = vld [vmem:[%s290 + $0x54] sm:$0xf]
      %v327 = vld [vmem:[%s290 + $0x58] sm:$0xf]
      %v328 = vld [vmem:[%s290 + $0x5c] sm:$0xf]
      %v329 = vld [vmem:[%s290 + $0x60] sm:$0xf]
      %v330 = vld [vmem:[%s290 + $0x64] sm:$0xf]
      %v331 = vld [vmem:[%s290 + $0x68] sm:$0xf]
      %v332 = vld [vmem:[%s290 + $0x6c] sm:$0xf]
      %v333 = vld [vmem:[%s290 + $0x70] sm:$0xf]
      %v334 = vld [vmem:[%s290 + $0x74] sm:$0xf]
      %v335 = vld [vmem:[%s290 + $0x78] sm:$0xf]
      %v336 = vld [vmem:[%s290 + $0x7c] sm:$0xf]
      %v337 = vld [vmem:[%s2] sm:$0xf]
      %v338 = vld [vmem:[%s2 + $0x4] sm:$0xf]
      %v339 = vld [vmem:[%s2 + $0x8] sm:$0xf]
      %v340 = vld [vmem:[%s2 + $0xc] sm:$0xf]
      %v341 = vld [vmem:[%s296] sm:$0xf]
      %v342 = vld [vmem:[%s296 + $0x4] sm:$0xf]
      %v343 = vld [vmem:[%s296 + $0x8] sm:$0xf]
      %v344 = vld [vmem:[%s296 + $0xc] sm:$0xf]
      %v345 = vld [vmem:[%s296 + $0x10] sm:$0xf]
      %v346 = vld [vmem:[%s296 + $0x14] sm:$0xf]
      %v347 = vld [vmem:[%s296 + $0x18] sm:$0xf]
      %v348 = vld [vmem:[%s296 + $0x1c] sm:$0xf]
      %v349 = vld [vmem:[%s296 + $0x20] sm:$0xf]
      %v350 = vld [vmem:[%s296 + $0x24] sm:$0xf]
      %v351 = vld [vmem:[%s296 + $0x28] sm:$0xf]
      %v352 = vld [vmem:[%s296 + $0x2c] sm:$0xf]
      %v353 = vld [vmem:[%s296 + $0x30] sm:$0xf]
      %v354 = vld [vmem:[%s296 + $0x34] sm:$0xf]
      %v355 = vld [vmem:[%s296 + $0x38] sm:$0xf]
      %v356 = vld [vmem:[%s296 + $0x3c] sm:$0xf]
      %v357 = vld [vmem:[%s296 + $0x40] sm:$0xf]
      %v358 = vld [vmem:[%s296 + $0x44] sm:$0xf]
      %v359 = vld [vmem:[%s296 + $0x48] sm:$0xf]
      %v360 = vld [vmem:[%s296 + $0x4c] sm:$0xf]
      %v361 = vld [vmem:[%s296 + $0x50] sm:$0xf]
      %v362 = vld [vmem:[%s296 + $0x54] sm:$0xf]
      %v363 = vld [vmem:[%s296 + $0x58] sm:$0xf]
      %v364 = vld [vmem:[%s296 + $0x5c] sm:$0xf]
      %v365 = vld [vmem:[%s296 + $0x60] sm:$0xf]
      %v366 = vld [vmem:[%s296 + $0x64] sm:$0xf]
      %v367 = vld [vmem:[%s296 + $0x68] sm:$0xf]
      %v368 = vld [vmem:[%s296 + $0x6c] sm:$0xf]
      %v369 = vld [vmem:[%s296 + $0x70] sm:$0xf]
      %v370 = vld [vmem:[%s296 + $0x74] sm:$0xf]
      %v371 = vld [vmem:[%s296 + $0x78] sm:$0xf]
      %v372 = vld [vmem:[%s296 + $0x7c] sm:$0xf]
      %v373 = vld [vmem:[%s3] sm:$0x1]
      %v406 = vunpack.c.l.b16 %v341
      %v407 = vunpack.c.l.b16 %v342
      %v408 = vunpack.c.l.b16 %v343
      %v409 = vunpack.c.l.b16 %v344
      %v410 = vunpack.c.l.b16 %v345
      %v411 = vunpack.c.l.b16 %v346
      %v412 = vunpack.c.l.b16 %v347
      %v413 = vunpack.c.l.b16 %v348
      %v414 = vunpack.c.l.b16 %v349
      %v415 = vunpack.c.l.b16 %v350
      %v416 = vunpack.c.l.b16 %v351
      %v417 = vunpack.c.l.b16 %v352
      %v418 = vunpack.c.l.b16 %v353
      %v419 = vunpack.c.l.b16 %v354
      %v420 = vunpack.c.l.b16 %v355
      %v421 = vunpack.c.l.b16 %v356
      %v422 = vunpack.c.l.b16 %v357
      %v423 = vunpack.c.l.b16 %v358
      %v424 = vunpack.c.l.b16 %v359
      %v425 = vunpack.c.l.b16 %v360
      %v426 = vunpack.c.l.b16 %v361
      %v427 = vunpack.c.l.b16 %v362
      %v428 = vunpack.c.l.b16 %v363
      %v429 = vunpack.c.l.b16 %v364
      %v430 = vunpack.c.l.b16 %v365
      %v431 = vunpack.c.l.b16 %v366
      %v432 = vunpack.c.l.b16 %v367
      %v433 = vunpack.c.l.b16 %v368
      %v434 = vunpack.c.l.b16 %v369
      %v435 = vunpack.c.l.b16 %v370
      %v436 = vunpack.c.l.b16 %v371
      %v437 = vunpack.c.l.b16 %v372
      %v438 = vpack.c.b16 %v407, %v406
      %v439 = vpack.c.b16 %v409, %v408
      %v440 = vpack.c.b16 %v411, %v410
      %v441 = vpack.c.b16 %v413, %v412
      %v442 = vpack.c.b16 %v415, %v414
      %v443 = vpack.c.b16 %v417, %v416
      %v444 = vpack.c.b16 %v419, %v418
      %v445 = vpack.c.b16 %v421, %v420
      %v446 = vpack.c.b16 %v423, %v422
      %v447 = vpack.c.b16 %v425, %v424
      %v448 = vpack.c.b16 %v427, %v426
      %v449 = vpack.c.b16 %v429, %v428
      %v450 = vpack.c.b16 %v431, %v430
      %v451 = vpack.c.b16 %v433, %v432
      %v452 = vpack.c.b16 %v435, %v434
      %v453 = vpack.c.b16 %v437, %v436
      %vm454 = vcmask 15360
      %v456 = vsel %vm454, %v438, 0
      %v459 = vsel %vm454, %v439, 0
      %v462 = vsel %vm454, %v440, 0
      %v465 = vsel %vm454, %v441, 0
      %v468 = vsel %vm454, %v442, 0
      %v471 = vsel %vm454, %v443, 0
      %v474 = vsel %vm454, %v444, 0
      %v477 = vsel %vm454, %v445, 0
      %v480 = vsel %vm454, %v446, 0
      %v483 = vsel %vm454, %v447, 0
      %v486 = vsel %vm454, %v448, 0
      %v489 = vsel %vm454, %v449, 0
      %v492 = vsel %vm454, %v450, 0
      %v495 = vsel %vm454, %v451, 0
      %v498 = vsel %vm454, %v452, 0
      %v501 = vsel %vm454, %v453, 0
      %vm503 = vcmask 1040384
      %v505 = vsel %vm503, %v373, 0
      %507 = vmatprep.subr.bf16.mxu0 0
      %508 = vmatpush1.bf16.msra.mxu0 %v505
      %509 = vmatprep.subr.bf16.mxu0 0
      %510 = vmatpush1.bf16.msra.mxu0 0
      %511 = vmatprep.subr.bf16.mxu0 0
      %512 = vmatpush1.bf16.msra.mxu0 0
      %513 = vmatprep.subr.bf16.mxu0 0
      %514 = vmatpush1.bf16.msra.mxu0 0
      %515 = vmatprep.subr.bf16.mxu0 0
      %516 = vmatpush1.bf16.msra.mxu0 0
      %517 = vmatprep.subr.bf16.mxu0 0
      %518 = vmatpush1.bf16.msra.mxu0 0
      %519 = vmatprep.subr.bf16.mxu0 0
      %520 = vmatpush1.bf16.msra.mxu0 0
      %521 = vmatprep.subr.bf16.mxu0 0
      %522 = vmatpush1.bf16.msra.mxu0 0
      %523 = vmatprep.subr.bf16.mxu0 0
      %524 = vmatpush1.bf16.msra.mxu0 0
      %525 = vmatprep.subr.bf16.mxu0 0
      %526 = vmatpush1.bf16.msra.mxu0 0
      %527 = vmatprep.subr.bf16.mxu0 0
      %528 = vmatpush1.bf16.msra.mxu0 0
      %529 = vmatprep.subr.bf16.mxu0 0
      %530 = vmatpush1.bf16.msra.mxu0 0
      %531 = vmatprep.subr.bf16.mxu0 0
      %532 = vmatpush1.bf16.msra.mxu0 0
      %533 = vmatprep.subr.bf16.mxu0 0
      %534 = vmatpush1.bf16.msra.mxu0 0
      %535 = vmatprep.subr.bf16.mxu0 0
      %536 = vmatpush1.bf16.msra.mxu0 0
      %537 = vmatprep.subr.bf16.mxu0 0
      %538 = vmatpush1.bf16.msra.mxu0 0
      %539 = vmatprep.mubr.bf16.mxu0 0
      %540 = vmatmul.mubr.bf16.gmra.mrb[0].mxu0 %v456
      %v541 = vpop.f32.mrb[0].mxu0
      %v542 = vadd.f32 0.0, %v541
      %v543 = vpop.f32.mrb[0].mxu0
      %v544 = vpop.f32.mrb[0].mxu0
      %v545 = vadd.f32 0.0, %v544
      %v546 = vpop.f32.mrb[0].mxu0
      %547 = vmatprep.mubr.bf16.mxu0 0
      %548 = vmatmul.mubr.bf16.gmra.mrb[0].mxu0 %v459
      %v549 = vpop.f32.mrb[0].mxu0
      %v550 = vadd.f32 0.0, %v549
      %v551 = vpop.f32.mrb[0].mxu0
      %v552 = vpop.f32.mrb[0].mxu0
      %v553 = vadd.f32 0.0, %v552
      %v554 = vpop.f32.mrb[0].mxu0
      %555 = vmatprep.mubr.bf16.mxu0 0
      %556 = vmatmul.mubr.bf16.gmra.mrb[0].mxu0 %v462
      %v557 = vpop.f32.mrb[0].mxu0
      %v558 = vadd.f32 0.0, %v557
      %v559 = vpop.f32.mrb[0].mxu0
      %v560 = vpop.f32.mrb[0].mxu0
      %v561 = vadd.f32 0.0, %v560
      %v562 = vpop.f32.mrb[0].mxu0
      %563 = vmatprep.mubr.bf16.mxu0 0
      %564 = vmatmul.mubr.bf16.gmra.mrb[0].mxu0 %v465
      %v565 = vpop.f32.mrb[0].mxu0
      %v566 = vadd.f32 0.0, %v565
      %v567 = vpop.f32.mrb[0].mxu0
      %v568 = vpop.f32.mrb[0].mxu0
      %v569 = vadd.f32 0.0, %v568
      %v570 = vpop.f32.mrb[0].mxu0
      %571 = vmatprep.mubr.bf16.mxu0 0
      %572 = vmatmul.mubr.bf16.gmra.mrb[0].mxu0 %v468
      %v573 = vpop.f32.mrb[0].mxu0
      %v574 = vadd.f32 0.0, %v573
      %v575 = vpop.f32.mrb[0].mxu0
      %v576 = vpop.f32.mrb[0].mxu0
      %v577 = vadd.f32 0.0, %v576
      %v578 = vpop.f32.mrb[0].mxu0
      %579 = vmatprep.mubr.bf16.mxu0 0
      %580 = vmatmul.mubr.bf16.gmra.mrb[0].mxu0 %v471
      %v581 = vpop.f32.mrb[0].mxu0
      %v582 = vadd.f32 0.0, %v581
      %v583 = vpop.f32.mrb[0].mxu0
      %v584 = vpop.f32.mrb[0].mxu0
      %v585 = vadd.f32 0.0, %v584
      %v586 = vpop.f32.mrb[0].mxu0
      %587 = vmatprep.mubr.bf16.mxu0 0
      %588 = vmatmul.mubr.bf16.gmra.mrb[0].mxu0 %v474
      %v589 = vpop.f32.mrb[0].mxu0
      %v590 = vadd.f32 0.0, %v589
      %v591 = vpop.f32.mrb[0].mxu0
      %v592 = vpop.f32.mrb[0].mxu0
      %v593 = vadd.f32 0.0, %v592
      %v594 = vpop.f32.mrb[0].mxu0
      %595 = vmatprep.mubr.bf16.mxu0 0
      %596 = vmatmul.mubr.bf16.gmra.mrb[0].mxu0 %v477
      %v597 = vpop.f32.mrb[0].mxu0
      %v598 = vadd.f32 0.0, %v597
      %v599 = vpop.f32.mrb[0].mxu0
      %v600 = vpop.f32.mrb[0].mxu0
      %v601 = vadd.f32 0.0, %v600
      %v602 = vpop.f32.mrb[0].mxu0
      %603 = vmatprep.mubr.bf16.mxu0 0
      %604 = vmatmul.mubr.bf16.gmra.mrb[0].mxu0 %v480
      %v605 = vpop.f32.mrb[0].mxu0
      %v606 = vadd.f32 0.0, %v605
      %v607 = vpop.f32.mrb[0].mxu0
      %v608 = vpop.f32.mrb[0].mxu0
      %v609 = vadd.f32 0.0, %v608
      %v610 = vpop.f32.mrb[0].mxu0
      %611 = vmatprep.mubr.bf16.mxu0 0
      %612 = vmatmul.mubr.bf16.gmra.mrb[0].mxu0 %v483
      %v613 = vpop.f32.mrb[0].mxu0
      %v614 = vadd.f32 0.0, %v613
      %v615 = vpop.f32.mrb[0].mxu0
      %v616 = vpop.f32.mrb[0].mxu0
      %v617 = vadd.f32 0.0, %v616
      %v618 = vpop.f32.mrb[0].mxu0
      %619 = vmatprep.mubr.bf16.mxu0 0
      %620 = vmatmul.mubr.bf16.gmra.mrb[0].mxu0 %v486
      %v621 = vpop.f32.mrb[0].mxu0
      %v622 = vadd.f32 0.0, %v621
      %v623 = vpop.f32.mrb[0].mxu0
      %v624 = vpop.f32.mrb[0].mxu0
      %v625 = vadd.f32 0.0, %v624
      %v626 = vpop.f32.mrb[0].mxu0
      %627 = vmatprep.mubr.bf16.mxu0 0
      %628 = vmatmul.mubr.bf16.gmra.mrb[0].mxu0 %v489
      %v629 = vpop.f32.mrb[0].mxu0
      %v630 = vadd.f32 0.0, %v629
      %v631 = vpop.f32.mrb[0].mxu0
      %v632 = vpop.f32.mrb[0].mxu0
      %v633 = vadd.f32 0.0, %v632
      %v634 = vpop.f32.mrb[0].mxu0
      %635 = vmatprep.mubr.bf16.mxu0 0
      %636 = vmatmul.mubr.bf16.gmra.mrb[0].mxu0 %v492
      %v637 = vpop.f32.mrb[0].mxu0
      %v638 = vadd.f32 0.0, %v637
      %v639 = vpop.f32.mrb[0].mxu0
      %v640 = vpop.f32.mrb[0].mxu0
      %v641 = vadd.f32 0.0, %v640
      %v642 = vpop.f32.mrb[0].mxu0
      %643 = vmatprep.mubr.bf16.mxu0 0
      %644 = vmatmul.mubr.bf16.gmra.mrb[0].mxu0 %v495
      %v645 = vpop.f32.mrb[0].mxu0
      %v646 = vadd.f32 0.0, %v645
      %v647 = vpop.f32.mrb[0].mxu0
      %v648 = vpop.f32.mrb[0].mxu0
      %v649 = vadd.f32 0.0, %v648
      %v650 = vpop.f32.mrb[0].mxu0
      %651 = vmatprep.mubr.bf16.mxu0 0
      %652 = vmatmul.mubr.bf16.gmra.mrb[0].mxu0 %v498
      %v653 = vpop.f32.mrb[0].mxu0
      %v654 = vadd.f32 0.0, %v653
      %v655 = vpop.f32.mrb[0].mxu0
      %v656 = vpop.f32.mrb[0].mxu0
      %v657 = vadd.f32 0.0, %v656
      %v658 = vpop.f32.mrb[0].mxu0
      %659 = vmatprep.mubr.bf16.mxu0 0
      %660 = vmatmul.mubr.bf16.gmra.mrb[0].mxu0 %v501
      %v661 = vpop.f32.mrb[0].mxu0
      %v662 = vadd.f32 0.0, %v661
      %v663 = vpop.f32.mrb[0].mxu0
      %v664 = vpop.f32.mrb[0].mxu0
      %v665 = vadd.f32 0.0, %v664
      %v666 = vpop.f32.mrb[0].mxu0
      %667 = vdwg.mxu0
      %v700 = vunpack.c.l.b16 %v305
      %v701 = vunpack.c.l.b16 %v306
      %v702 = vunpack.c.l.b16 %v307
      %v703 = vunpack.c.l.b16 %v308
      %v704 = vunpack.c.l.b16 %v309
      %v705 = vunpack.c.l.b16 %v310
      %v706 = vunpack.c.l.b16 %v311
      %v707 = vunpack.c.l.b16 %v312
      %v708 = vunpack.c.l.b16 %v313
      %v709 = vunpack.c.l.b16 %v314
      %v710 = vunpack.c.l.b16 %v315
      %v711 = vunpack.c.l.b16 %v316
      %v712 = vunpack.c.l.b16 %v317
      %v713 = vunpack.c.l.b16 %v318
      %v714 = vunpack.c.l.b16 %v319
      %v715 = vunpack.c.l.b16 %v320
      %v716 = vunpack.c.l.b16 %v321
      %v717 = vunpack.c.l.b16 %v322
      %v718 = vunpack.c.l.b16 %v323
      %v719 = vunpack.c.l.b16 %v324
      %v720 = vunpack.c.l.b16 %v325
      %v721 = vunpack.c.l.b16 %v326
      %v722 = vunpack.c.l.b16 %v327
      %v723 = vunpack.c.l.b16 %v328
      %v724 = vunpack.c.l.b16 %v329
      %v725 = vunpack.c.l.b16 %v330
      %v726 = vunpack.c.l.b16 %v331
      %v727 = vunpack.c.l.b16 %v332
      %v728 = vunpack.c.l.b16 %v333
      %v729 = vunpack.c.l.b16 %v334
      %v730 = vunpack.c.l.b16 %v335
      %v731 = vunpack.c.l.b16 %v336
      %v732 = vpack.c.b16 %v701, %v700
      %v733 = vpack.c.b16 %v703, %v702
      %v734 = vpack.c.b16 %v705, %v704
      %v735 = vpack.c.b16 %v707, %v706
      %v736 = vpack.c.b16 %v709, %v708
      %v737 = vpack.c.b16 %v711, %v710
      %v738 = vpack.c.b16 %v713, %v712
      %v739 = vpack.c.b16 %v715, %v714
      %v740 = vpack.c.b16 %v717, %v716
      %v741 = vpack.c.b16 %v719, %v718
      %v742 = vpack.c.b16 %v721, %v720
      %v743 = vpack.c.b16 %v723, %v722
      %v744 = vpack.c.b16 %v725, %v724
      %v745 = vpack.c.b16 %v727, %v726
      %v746 = vpack.c.b16 %v729, %v728
      %v747 = vpack.c.b16 %v731, %v730
      %v752 = vunpack.c.l.b16 %v337
      %v753 = vunpack.c.l.b16 %v338
      %v754 = vunpack.c.l.b16 %v339
      %v755 = vunpack.c.l.b16 %v340
      %v756 = vpack.c.b16 %v753, %v752
      %v757 = vpack.c.b16 %v755, %v754
      %vm760 = vcmask 261120
      %v762 = vsel %vm760, %v732, 0
      %v765 = vsel %vm760, %v733, 0
      %v768 = vsel %vm760, %v734, 0
      %v771 = vsel %vm760, %v735, 0
      %v774 = vsel %vm760, %v736, 0
      %v777 = vsel %vm760, %v737, 0
      %v780 = vsel %vm760, %v738, 0
      %v783 = vsel %vm760, %v739, 0
      %v786 = vsel %vm760, %v740, 0
      %v789 = vsel %vm760, %v741, 0
      %v792 = vsel %vm760, %v742, 0
      %v795 = vsel %vm760, %v743, 0
      %v798 = vsel %vm760, %v744, 0
      %v801 = vsel %vm760, %v745, 0
      %v804 = vsel %vm760, %v746, 0
      %v807 = vsel %vm760, %v747, 0
      %809 = vmatprep.subr.bf16.mxu0 0
      %810 = vmatpush1.bf16.msra.mxu0 %v756
      %811 = vmatprep.subr.bf16.mxu0 0
      %812 = vmatpush1.bf16.msra.mxu0 %v757
      %813 = vmatprep.subr.bf16.mxu0 0
      %814 = vmatpush1.bf16.msra.mxu0 0
      %815 = vmatprep.subr.bf16.mxu0 0
      %816 = vmatpush1.bf16.msra.mxu0 0
      %817 = vmatprep.subr.bf16.mxu0 0
      %818 = vmatpush1.bf16.msra.mxu0 0
      %819 = vmatprep.subr.bf16.mxu0 0
      %820 = vmatpush1.bf16.msra.mxu0 0
      %821 = vmatprep.subr.bf16.mxu0 0
      %822 = vmatpush1.bf16.msra.mxu0 0
      %823 = vmatprep.subr.bf16.mxu0 0
      %824 = vmatpush1.bf16.msra.mxu0 0
      %825 = vmatprep.subr.bf16.mxu0 0
      %826 = vmatpush1.bf16.msra.mxu0 0
      %827 = vmatprep.subr.bf16.mxu0 0
      %828 = vmatpush1.bf16.msra.mxu0 0
      %829 = vmatprep.subr.bf16.mxu0 0
      %830 = vmatpush1.bf16.msra.mxu0 0
      %831 = vmatprep.subr.bf16.mxu0 0
      %832 = vmatpush1.bf16.msra.mxu0 0
      %833 = vmatprep.subr.bf16.mxu0 0
      %834 = vmatpush1.bf16.msra.mxu0 0
      %835 = vmatprep.subr.bf16.mxu0 0
      %836 = vmatpush1.bf16.msra.mxu0 0
      %837 = vmatprep.subr.bf16.mxu0 0
      %838 = vmatpush1.bf16.msra.mxu0 0
      %839 = vmatprep.subr.bf16.mxu0 0
      %840 = vmatpush1.bf16.msra.mxu0 0
      %841 = vmatprep.mubr.bf16.mxu0 0
      %842 = vmatmul.mubr.bf16.gmra.mrb[0].mxu0 %v762
      %v843 = vpop.f32.mrb[0].mxu0
      %v844 = vadd.f32 %v542, %v843
      %v845 = vpop.f32.mrb[0].mxu0
      %v846 = vpop.f32.mrb[0].mxu0
      %v847 = vadd.f32 %v545, %v846
      %v848 = vpop.f32.mrb[0].mxu0
      %849 = vmatprep.mubr.bf16.mxu0 0
      %850 = vmatmul.mubr.bf16.gmra.mrb[0].mxu0 %v765
      %v851 = vpop.f32.mrb[0].mxu0
      %v852 = vadd.f32 %v550, %v851
      %v853 = vpop.f32.mrb[0].mxu0
      %v854 = vpop.f32.mrb[0].mxu0
      %v855 = vadd.f32 %v553, %v854
      %v856 = vpop.f32.mrb[0].mxu0
      %857 = vmatprep.mubr.bf16.mxu0 0
      %858 = vmatmul.mubr.bf16.gmra.mrb[0].mxu0 %v768
      %v859 = vpop.f32.mrb[0].mxu0
      %v860 = vadd.f32 %v558, %v859
      %v861 = vpop.f32.mrb[0].mxu0
      %v862 = vpop.f32.mrb[0].mxu0
      %v863 = vadd.f32 %v561, %v862
      %v864 = vpop.f32.mrb[0].mxu0
      %865 = vmatprep.mubr.bf16.mxu0 0
      %866 = vmatmul.mubr.bf16.gmra.mrb[0].mxu0 %v771
      %v867 = vpop.f32.mrb[0].mxu0
      %v868 = vadd.f32 %v566, %v867
      %v869 = vpop.f32.mrb[0].mxu0
      %v870 = vpop.f32.mrb[0].mxu0
      %v871 = vadd.f32 %v569, %v870
      %v872 = vpop.f32.mrb[0].mxu0
      %873 = vmatprep.mubr.bf16.mxu0 0
      %874 = vmatmul.mubr.bf16.gmra.mrb[0].mxu0 %v774
      %v875 = vpop.f32.mrb[0].mxu0
      %v876 = vadd.f32 %v574, %v875
      %v877 = vpop.f32.mrb[0].mxu0
      %v878 = vpop.f32.mrb[0].mxu0
      %v879 = vadd.f32 %v577, %v878
      %v880 = vpop.f32.mrb[0].mxu0
      %881 = vmatprep.mubr.bf16.mxu0 0
      %882 = vmatmul.mubr.bf16.gmra.mrb[0].mxu0 %v777
      %v883 = vpop.f32.mrb[0].mxu0
      %v884 = vadd.f32 %v582, %v883
      %v885 = vpop.f32.mrb[0].mxu0
      %v886 = vpop.f32.mrb[0].mxu0
      %v887 = vadd.f32 %v585, %v886
      %v888 = vpop.f32.mrb[0].mxu0
      %889 = vmatprep.mubr.bf16.mxu0 0
      %890 = vmatmul.mubr.bf16.gmra.mrb[0].mxu0 %v780
      %v891 = vpop.f32.mrb[0].mxu0
      %v892 = vadd.f32 %v590, %v891
      %v893 = vpop.f32.mrb[0].mxu0
      %v894 = vpop.f32.mrb[0].mxu0
      %v895 = vadd.f32 %v593, %v894
      %v896 = vpop.f32.mrb[0].mxu0
      %897 = vmatprep.mubr.bf16.mxu0 0
      %898 = vmatmul.mubr.bf16.gmra.mrb[0].mxu0 %v783
      %v899 = vpop.f32.mrb[0].mxu0
      %v900 = vadd.f32 %v598, %v899
      %v901 = vpop.f32.mrb[0].mxu0
      %v902 = vpop.f32.mrb[0].mxu0
      %v903 = vadd.f32 %v601, %v902
      %v904 = vpop.f32.mrb[0].mxu0
      %905 = vmatprep.mubr.bf16.mxu0 0
      %906 = vmatmul.mubr.bf16.gmra.mrb[0].mxu0 %v786
      %v907 = vpop.f32.mrb[0].mxu0
      %v908 = vadd.f32 %v606, %v907
      %v909 = vpop.f32.mrb[0].mxu0
      %v910 = vpop.f32.mrb[0].mxu0
      %v911 = vadd.f32 %v609, %v910
      %v912 = vpop.f32.mrb[0].mxu0
      %913 = vmatprep.mubr.bf16.mxu0 0
      %914 = vmatmul.mubr.bf16.gmra.mrb[0].mxu0 %v789
      %v915 = vpop.f32.mrb[0].mxu0
      %v916 = vadd.f32 %v614, %v915
      %v917 = vpop.f32.mrb[0].mxu0
      %v918 = vpop.f32.mrb[0].mxu0
      %v919 = vadd.f32 %v617, %v918
      %v920 = vpop.f32.mrb[0].mxu0
      %921 = vmatprep.mubr.bf16.mxu0 0
      %922 = vmatmul.mubr.bf16.gmra.mrb[0].mxu0 %v792
      %v923 = vpop.f32.mrb[0].mxu0
      %v924 = vadd.f32 %v622, %v923
      %v925 = vpop.f32.mrb[0].mxu0
      %v926 = vpop.f32.mrb[0].mxu0
      %v927 = vadd.f32 %v625, %v926
      %v928 = vpop.f32.mrb[0].mxu0
      %929 = vmatprep.mubr.bf16.mxu0 0
      %930 = vmatmul.mubr.bf16.gmra.mrb[0].mxu0 %v795
      %v931 = vpop.f32.mrb[0].mxu0
      %v932 = vadd.f32 %v630, %v931
      %v933 = vpop.f32.mrb[0].mxu0
      %v934 = vpop.f32.mrb[0].mxu0
      %v935 = vadd.f32 %v633, %v934
      %v936 = vpop.f32.mrb[0].mxu0
      %937 = vmatprep.mubr.bf16.mxu0 0
      %938 = vmatmul.mubr.bf16.gmra.mrb[0].mxu0 %v798
      %v939 = vpop.f32.mrb[0].mxu0
      %v940 = vadd.f32 %v638, %v939
      %v941 = vpop.f32.mrb[0].mxu0
      %v942 = vpop.f32.mrb[0].mxu0
      %v943 = vadd.f32 %v641, %v942
      %v944 = vpop.f32.mrb[0].mxu0
      %945 = vmatprep.mubr.bf16.mxu0 0
      %946 = vmatmul.mubr.bf16.gmra.mrb[0].mxu0 %v801
      %v947 = vpop.f32.mrb[0].mxu0
      %v948 = vadd.f32 %v646, %v947
      %v949 = vpop.f32.mrb[0].mxu0
      %v950 = vpop.f32.mrb[0].mxu0
      %v951 = vadd.f32 %v649, %v950
      %v952 = vpop.f32.mrb[0].mxu0
      %953 = vmatprep.mubr.bf16.mxu0 0
      %954 = vmatmul.mubr.bf16.gmra.mrb[0].mxu0 %v804
      %v955 = vpop.f32.mrb[0].mxu0
      %v956 = vadd.f32 %v654, %v955
      %v957 = vpop.f32.mrb[0].mxu0
      %v958 = vpop.f32.mrb[0].mxu0
      %v959 = vadd.f32 %v657, %v958
      %v960 = vpop.f32.mrb[0].mxu0
      %961 = vmatprep.mubr.bf16.mxu0 0
      %962 = vmatmul.mubr.bf16.gmra.mrb[0].mxu0 %v807
      %v963 = vpop.f32.mrb[0].mxu0
      %v964 = vadd.f32 %v662, %v963
      %v965 = vpop.f32.mrb[0].mxu0
      %v966 = vpop.f32.mrb[0].mxu0
      %v967 = vadd.f32 %v665, %v966
      %v968 = vpop.f32.mrb[0].mxu0
      %969 = vdwg.mxu0
      %v970 = vld [vmem:[%s4] sm:$0x1]
      %v972 = vlaneseq
      %v973 = vshrl.u32 %v972, 7
      %v974 = vsub.s32 0, %v973
      %v975 = vrot.slane %v970, %v974
      %v977 = vadd.f32 %v844, %v975
      %v978 = vadd.f32 %v847, %v975
      %v979 = vadd.f32 %v852, %v975
      %v980 = vadd.f32 %v855, %v975
      %v981 = vadd.f32 %v860, %v975
      %v982 = vadd.f32 %v863, %v975
      %v983 = vadd.f32 %v868, %v975
      %v984 = vadd.f32 %v871, %v975
      %v985 = vadd.f32 %v876, %v975
      %v986 = vadd.f32 %v879, %v975
      %v987 = vadd.f32 %v884, %v975
      %v988 = vadd.f32 %v887, %v975
      %v989 = vadd.f32 %v892, %v975
      %v990 = vadd.f32 %v895, %v975
      %v991 = vadd.f32 %v900, %v975
      %v992 = vadd.f32 %v903, %v975
      %v993 = vadd.f32 %v908, %v975
      %v994 = vadd.f32 %v911, %v975
      %v995 = vadd.f32 %v916, %v975
      %v996 = vadd.f32 %v919, %v975
      %v997 = vadd.f32 %v924, %v975
      %v998 = vadd.f32 %v927, %v975
      %v999 = vadd.f32 %v932, %v975
      %v1000 = vadd.f32 %v935, %v975
      %v1001 = vadd.f32 %v940, %v975
      %v1002 = vadd.f32 %v943, %v975
      %v1003 = vadd.f32 %v948, %v975
      %v1004 = vadd.f32 %v951, %v975
      %v1005 = vadd.f32 %v956, %v975
      %v1006 = vadd.f32 %v959, %v975
      %v1007 = vadd.f32 %v964, %v975
      %v1008 = vadd.f32 %v967, %v975
      %v1009 = vmax.f32 %v977, 0.0
      %v1010 = vmax.f32 %v978, 0.0
      %v1011 = vmax.f32 %v979, 0.0
      %v1012 = vmax.f32 %v980, 0.0
      %v1013 = vmax.f32 %v981, 0.0
      %v1014 = vmax.f32 %v982, 0.0
      %v1015 = vmax.f32 %v983, 0.0
      %v1016 = vmax.f32 %v984, 0.0
      %v1017 = vmax.f32 %v985, 0.0
      %v1018 = vmax.f32 %v986, 0.0
      %v1019 = vmax.f32 %v987, 0.0
      %v1020 = vmax.f32 %v988, 0.0
      %v1021 = vmax.f32 %v989, 0.0
      %v1022 = vmax.f32 %v990, 0.0
      %v1023 = vmax.f32 %v991, 0.0
      %v1024 = vmax.f32 %v992, 0.0
      %v1025 = vmax.f32 %v993, 0.0
      %v1026 = vmax.f32 %v994, 0.0
      %v1027 = vmax.f32 %v995, 0.0
      %v1028 = vmax.f32 %v996, 0.0
      %v1029 = vmax.f32 %v997, 0.0
      %v1030 = vmax.f32 %v998, 0.0
      %v1031 = vmax.f32 %v999, 0.0
      %v1032 = vmax.f32 %v1000, 0.0
      %v1033 = vmax.f32 %v1001, 0.0
      %v1034 = vmax.f32 %v1002, 0.0
      %v1035 = vmax.f32 %v1003, 0.0
      %v1036 = vmax.f32 %v1004, 0.0
      %v1037 = vmax.f32 %v1005, 0.0
      %v1038 = vmax.f32 %v1006, 0.0
      %v1039 = vmax.f32 %v1007, 0.0
      %v1040 = vmax.f32 %v1008, 0.0
      %v1041 = vpack.c.bf16 %v1010, %v1009
      %v1042 = vpack.c.bf16 %v1012, %v1011
      %v1043 = vpack.c.bf16 %v1014, %v1013
      %v1044 = vpack.c.bf16 %v1016, %v1015
      %v1045 = vpack.c.bf16 %v1018, %v1017
      %v1046 = vpack.c.bf16 %v1020, %v1019
      %v1047 = vpack.c.bf16 %v1022, %v1021
      %v1048 = vpack.c.bf16 %v1024, %v1023
      %v1049 = vpack.c.bf16 %v1026, %v1025
      %v1050 = vpack.c.bf16 %v1028, %v1027
      %v1051 = vpack.c.bf16 %v1030, %v1029
      %v1052 = vpack.c.bf16 %v1032, %v1031
      %v1053 = vpack.c.bf16 %v1034, %v1033
      %v1054 = vpack.c.bf16 %v1036, %v1035
      %v1055 = vpack.c.bf16 %v1038, %v1037
      %v1056 = vpack.c.bf16 %v1040, %v1039
      %v1057 = vld [vmem:[%s5] sm:$0xf]
      %v1058 = vld [vmem:[%s5 + $0x4] sm:$0xf]
      %v1059 = vld [vmem:[%s5 + $0x8] sm:$0xf]
      %v1060 = vld [vmem:[%s5 + $0xc] sm:$0xf]
      %v1061 = vld [vmem:[%s5 + $0x10] sm:$0xf]
      %v1062 = vld [vmem:[%s5 + $0x14] sm:$0xf]
      %v1063 = vld [vmem:[%s5 + $0x18] sm:$0xf]
      %v1064 = vld [vmem:[%s5 + $0x1c] sm:$0xf]
      %v1065 = vld [vmem:[%s6] sm:$0x1]
      %v1067 = vlaneseq
      %v1068 = vshrl.u32 %v1067, 7
      %v1069 = vsub.s32 0, %v1068
      %v1070 = vrot.slane %v1065, %v1069
      %v1080 = vunpack.c.l.b16 %v1057
      %v1081 = vunpack.c.l.b16 %v1058
      %v1082 = vunpack.c.l.b16 %v1059
      %v1083 = vunpack.c.l.b16 %v1060
      %v1084 = vunpack.c.l.b16 %v1061
      %v1085 = vunpack.c.l.b16 %v1062
      %v1086 = vunpack.c.l.b16 %v1063
      %v1087 = vunpack.c.l.b16 %v1064
      %v1088 = vpack.c.b16 %v1081, %v1080
      %v1089 = vpack.c.b16 %v1083, %v1082
      %v1090 = vpack.c.b16 %v1085, %v1084
      %v1091 = vpack.c.b16 %v1087, %v1086
      %vm1096 = vcmask 523264
      %v1098 = vsel %vm1096, %v1041, 0
      %v1101 = vsel %vm1096, %v1042, 0
      %v1104 = vsel %vm1096, %v1043, 0
      %v1107 = vsel %vm1096, %v1044, 0
      %v1110 = vsel %vm1096, %v1045, 0
      %v1113 = vsel %vm1096, %v1046, 0
      %v1116 = vsel %vm1096, %v1047, 0
      %v1119 = vsel %vm1096, %v1048, 0
      %v1122 = vsel %vm1096, %v1049, 0
      %v1125 = vsel %vm1096, %v1050, 0
      %v1128 = vsel %vm1096, %v1051, 0
      %v1131 = vsel %vm1096, %v1052, 0
      %v1134 = vsel %vm1096, %v1053, 0
      %v1137 = vsel %vm1096, %v1054, 0
      %v1140 = vsel %vm1096, %v1055, 0
      %v1143 = vsel %vm1096, %v1056, 0
      %1145 = vmatprep.subr.bf16.mxu0 0
      %1146 = vmatpush1.bf16.msra.mxu0 %v1088
      %1147 = vmatprep.subr.bf16.mxu0 0
      %1148 = vmatpush1.bf16.msra.mxu0 %v1089
      %1149 = vmatprep.subr.bf16.mxu0 0
      %1150 = vmatpush1.bf16.msra.mxu0 %v1090
      %1151 = vmatprep.subr.bf16.mxu0 0
      %1152 = vmatpush1.bf16.msra.mxu0 %v1091
      %1153 = vmatprep.subr.bf16.mxu0 0
      %1154 = vmatpush1.bf16.msra.mxu0 0
      %1155 = vmatprep.subr.bf16.mxu0 0
      %1156 = vmatpush1.bf16.msra.mxu0 0
      %1157 = vmatprep.subr.bf16.mxu0 0
      %1158 = vmatpush1.bf16.msra.mxu0 0
      %1159 = vmatprep.subr.bf16.mxu0 0
      %1160 = vmatpush1.bf16.msra.mxu0 0
      %1161 = vmatprep.subr.bf16.mxu0 0
      %1162 = vmatpush1.bf16.msra.mxu0 0
      %1163 = vmatprep.subr.bf16.mxu0 0
      %1164 = vmatpush1.bf16.msra.mxu0 0
      %1165 = vmatprep.subr.bf16.mxu0 0
      %1166 = vmatpush1.bf16.msra.mxu0 0
      %1167 = vmatprep.subr.bf16.mxu0 0
      %1168 = vmatpush1.bf16.msra.mxu0 0
      %1169 = vmatprep.subr.bf16.mxu0 0
      %1170 = vmatpush1.bf16.msra.mxu0 0
      %1171 = vmatprep.subr.bf16.mxu0 0
      %1172 = vmatpush1.bf16.msra.mxu0 0
      %1173 = vmatprep.subr.bf16.mxu0 0
      %1174 = vmatpush1.bf16.msra.mxu0 0
      %1175 = vmatprep.subr.bf16.mxu0 0
      %1176 = vmatpush1.bf16.msra.mxu0 0
      %1177 = vmatprep.mubr.bf16.mxu0 0
      %1178 = vmatmul.mubr.bf16.gmra.mrb[0].mxu0 %v1098
      %v1179 = vpop.f32.mrb[0].mxu0
      %v1180 = vadd.f32 %v1070, %v1179
      %v1181 = vpop.f32.mrb[0].mxu0
      %v1182 = vpop.f32.mrb[0].mxu0
      %v1183 = vadd.f32 %v1070, %v1182
      %v1184 = vpop.f32.mrb[0].mxu0
      %1185 = vmatprep.mubr.bf16.mxu0 0
      %1186 = vmatmul.mubr.bf16.gmra.mrb[0].mxu0 %v1101
      %v1187 = vpop.f32.mrb[0].mxu0
      %v1188 = vadd.f32 %v1070, %v1187
      %v1189 = vpop.f32.mrb[0].mxu0
      %v1190 = vpop.f32.mrb[0].mxu0
      %v1191 = vadd.f32 %v1070, %v1190
      %v1192 = vpop.f32.mrb[0].mxu0
      %1193 = vmatprep.mubr.bf16.mxu0 0
      %1194 = vmatmul.mubr.bf16.gmra.mrb[0].mxu0 %v1104
      %v1195 = vpop.f32.mrb[0].mxu0
      %v1196 = vadd.f32 %v1070, %v1195
      %v1197 = vpop.f32.mrb[0].mxu0
      %v1198 = vpop.f32.mrb[0].mxu0
      %v1199 = vadd.f32 %v1070, %v1198
      %v1200 = vpop.f32.mrb[0].mxu0
      %1201 = vmatprep.mubr.bf16.mxu0 0
      %1202 = vmatmul.mubr.bf16.gmra.mrb[0].mxu0 %v1107
      %v1203 = vpop.f32.mrb[0].mxu0
      %v1204 = vadd.f32 %v1070, %v1203
      %v1205 = vpop.f32.mrb[0].mxu0
      %v1206 = vpop.f32.mrb[0].mxu0
      %v1207 = vadd.f32 %v1070, %v1206
      %v1208 = vpop.f32.mrb[0].mxu0
      %1209 = vmatprep.mubr.bf16.mxu0 0
      %1210 = vmatmul.mubr.bf16.gmra.mrb[0].mxu0 %v1110
      %v1211 = vpop.f32.mrb[0].mxu0
      %v1212 = vadd.f32 %v1070, %v1211
      %v1213 = vpop.f32.mrb[0].mxu0
      %v1214 = vpop.f32.mrb[0].mxu0
      %v1215 = vadd.f32 %v1070, %v1214
      %v1216 = vpop.f32.mrb[0].mxu0
      %1217 = vmatprep.mubr.bf16.mxu0 0
      %1218 = vmatmul.mubr.bf16.gmra.mrb[0].mxu0 %v1113
      %v1219 = vpop.f32.mrb[0].mxu0
      %v1220 = vadd.f32 %v1070, %v1219
      %v1221 = vpop.f32.mrb[0].mxu0
      %v1222 = vpop.f32.mrb[0].mxu0
      %v1223 = vadd.f32 %v1070, %v1222
      %v1224 = vpop.f32.mrb[0].mxu0
      %1225 = vmatprep.mubr.bf16.mxu0 0
      %1226 = vmatmul.mubr.bf16.gmra.mrb[0].mxu0 %v1116
      %v1227 = vpop.f32.mrb[0].mxu0
      %v1228 = vadd.f32 %v1070, %v1227
      %v1229 = vpop.f32.mrb[0].mxu0
      %v1230 = vpop.f32.mrb[0].mxu0
      %v1231 = vadd.f32 %v1070, %v1230
      %v1232 = vpop.f32.mrb[0].mxu0
      %1233 = vmatprep.mubr.bf16.mxu0 0
      %1234 = vmatmul.mubr.bf16.gmra.mrb[0].mxu0 %v1119
      %v1235 = vpop.f32.mrb[0].mxu0
      %v1236 = vadd.f32 %v1070, %v1235
      %v1237 = vpop.f32.mrb[0].mxu0
      %v1238 = vpop.f32.mrb[0].mxu0
      %v1239 = vadd.f32 %v1070, %v1238
      %v1240 = vpop.f32.mrb[0].mxu0
      %1241 = vmatprep.mubr.bf16.mxu0 0
      %1242 = vmatmul.mubr.bf16.gmra.mrb[0].mxu0 %v1122
      %v1243 = vpop.f32.mrb[0].mxu0
      %v1244 = vadd.f32 %v1070, %v1243
      %v1245 = vpop.f32.mrb[0].mxu0
      %v1246 = vpop.f32.mrb[0].mxu0
      %v1247 = vadd.f32 %v1070, %v1246
      %v1248 = vpop.f32.mrb[0].mxu0
      %1249 = vmatprep.mubr.bf16.mxu0 0
      %1250 = vmatmul.mubr.bf16.gmra.mrb[0].mxu0 %v1125
      %v1251 = vpop.f32.mrb[0].mxu0
      %v1252 = vadd.f32 %v1070, %v1251
      %v1253 = vpop.f32.mrb[0].mxu0
      %v1254 = vpop.f32.mrb[0].mxu0
      %v1255 = vadd.f32 %v1070, %v1254
      %v1256 = vpop.f32.mrb[0].mxu0
      %1257 = vmatprep.mubr.bf16.mxu0 0
      %1258 = vmatmul.mubr.bf16.gmra.mrb[0].mxu0 %v1128
      %v1259 = vpop.f32.mrb[0].mxu0
      %v1260 = vadd.f32 %v1070, %v1259
      %v1261 = vpop.f32.mrb[0].mxu0
      %v1262 = vpop.f32.mrb[0].mxu0
      %v1263 = vadd.f32 %v1070, %v1262
      %v1264 = vpop.f32.mrb[0].mxu0
      %1265 = vmatprep.mubr.bf16.mxu0 0
      %1266 = vmatmul.mubr.bf16.gmra.mrb[0].mxu0 %v1131
      %v1267 = vpop.f32.mrb[0].mxu0
      %v1268 = vadd.f32 %v1070, %v1267
      %v1269 = vpop.f32.mrb[0].mxu0
      %v1270 = vpop.f32.mrb[0].mxu0
      %v1271 = vadd.f32 %v1070, %v1270
      %v1272 = vpop.f32.mrb[0].mxu0
      %1273 = vmatprep.mubr.bf16.mxu0 0
      %1274 = vmatmul.mubr.bf16.gmra.mrb[0].mxu0 %v1134
      %v1275 = vpop.f32.mrb[0].mxu0
      %v1276 = vadd.f32 %v1070, %v1275
      %v1277 = vpop.f32.mrb[0].mxu0
      %v1278 = vpop.f32.mrb[0].mxu0
      %v1279 = vadd.f32 %v1070, %v1278
      %v1280 = vpop.f32.mrb[0].mxu0
      %1281 = vmatprep.mubr.bf16.mxu0 0
      %1282 = vmatmul.mubr.bf16.gmra.mrb[0].mxu0 %v1137
      %v1283 = vpop.f32.mrb[0].mxu0
      %v1284 = vadd.f32 %v1070, %v1283
      %v1285 = vpop.f32.mrb[0].mxu0
      %v1286 = vpop.f32.mrb[0].mxu0
      %v1287 = vadd.f32 %v1070, %v1286
      %v1288 = vpop.f32.mrb[0].mxu0
      %1289 = vmatprep.mubr.bf16.mxu0 0
      %1290 = vmatmul.mubr.bf16.gmra.mrb[0].mxu0 %v1140
      %v1291 = vpop.f32.mrb[0].mxu0
      %v1292 = vadd.f32 %v1070, %v1291
      %v1293 = vpop.f32.mrb[0].mxu0
      %v1294 = vpop.f32.mrb[0].mxu0
      %v1295 = vadd.f32 %v1070, %v1294
      %v1296 = vpop.f32.mrb[0].mxu0
      %1297 = vmatprep.mubr.bf16.mxu0 0
      %1298 = vmatmul.mubr.bf16.gmra.mrb[0].mxu0 %v1143
      %v1299 = vpop.f32.mrb[0].mxu0
      %v1300 = vadd.f32 %v1070, %v1299
      %v1301 = vpop.f32.mrb[0].mxu0
      %v1302 = vpop.f32.mrb[0].mxu0
      %v1303 = vadd.f32 %v1070, %v1302
      %v1304 = vpop.f32.mrb[0].mxu0
      %1305 = vdwg.mxu0
      %v1306 = vpack.c.bf16 %v1183, %v1180
      %v1307 = vpack.c.bf16 %v1191, %v1188
      %v1308 = vpack.c.bf16 %v1199, %v1196
      %v1309 = vpack.c.bf16 %v1207, %v1204
      %v1310 = vpack.c.bf16 %v1215, %v1212
      %v1311 = vpack.c.bf16 %v1223, %v1220
      %v1312 = vpack.c.bf16 %v1231, %v1228
      %v1313 = vpack.c.bf16 %v1239, %v1236
      %v1314 = vpack.c.bf16 %v1247, %v1244
      %v1315 = vpack.c.bf16 %v1255, %v1252
      %v1316 = vpack.c.bf16 %v1263, %v1260
      %v1317 = vpack.c.bf16 %v1271, %v1268
      %v1318 = vpack.c.bf16 %v1279, %v1276
      %v1319 = vpack.c.bf16 %v1287, %v1284
      %v1320 = vpack.c.bf16 %v1295, %v1292
      %v1321 = vpack.c.bf16 %v1303, %v1300
      %v1338 = vunpack.c.l.b16 %v1306
      %v1339 = vunpack.c.h.b16 %v1306
      %v1340 = vunpack.c.l.b16 %v1307
      %v1341 = vunpack.c.h.b16 %v1307
      %v1342 = vunpack.c.l.b16 %v1308
      %v1343 = vunpack.c.h.b16 %v1308
      %v1344 = vunpack.c.l.b16 %v1309
      %v1345 = vunpack.c.h.b16 %v1309
      %v1346 = vunpack.c.l.b16 %v1310
      %v1347 = vunpack.c.h.b16 %v1310
      %v1348 = vunpack.c.l.b16 %v1311
      %v1349 = vunpack.c.h.b16 %v1311
      %v1350 = vunpack.c.l.b16 %v1312
      %v1351 = vunpack.c.h.b16 %v1312
      %v1352 = vunpack.c.l.b16 %v1313
      %v1353 = vunpack.c.h.b16 %v1313
      %v1354 = vunpack.c.l.b16 %v1314
      %v1355 = vunpack.c.h.b16 %v1314
      %v1356 = vunpack.c.l.b16 %v1315
      %v1357 = vunpack.c.h.b16 %v1315
      %v1358 = vunpack.c.l.b16 %v1316
      %v1359 = vunpack.c.h.b16 %v1316
      %v1360 = vunpack.c.l.b16 %v1317
      %v1361 = vunpack.c.h.b16 %v1317
      %v1362 = vunpack.c.l.b16 %v1318
      %v1363 = vunpack.c.h.b16 %v1318
      %v1364 = vunpack.c.l.b16 %v1319
      %v1365 = vunpack.c.h.b16 %v1319
      %v1366 = vunpack.c.l.b16 %v1320
      %v1367 = vunpack.c.h.b16 %v1320
      %v1368 = vunpack.c.l.b16 %v1321
      %v1369 = vunpack.c.h.b16 %v1321
      %v1370 = vpack.c.b16 %v1338, %v1338
      %v1371 = vpack.c.b16 %v1339, %v1339
      %v1372 = vpack.c.b16 %v1340, %v1340
      %v1373 = vpack.c.b16 %v1341, %v1341
      %v1374 = vpack.c.b16 %v1342, %v1342
      %v1375 = vpack.c.b16 %v1343, %v1343
      %v1376 = vpack.c.b16 %v1344, %v1344
      %v1377 = vpack.c.b16 %v1345, %v1345
      %v1378 = vpack.c.b16 %v1346, %v1346
      %v1379 = vpack.c.b16 %v1347, %v1347
      %v1380 = vpack.c.b16 %v1348, %v1348
      %v1381 = vpack.c.b16 %v1349, %v1349
      %v1382 = vpack.c.b16 %v1350, %v1350
      %v1383 = vpack.c.b16 %v1351, %v1351
      %v1384 = vpack.c.b16 %v1352, %v1352
      %v1385 = vpack.c.b16 %v1353, %v1353
      %v1386 = vpack.c.b16 %v1354, %v1354
      %v1387 = vpack.c.b16 %v1355, %v1355
      %v1388 = vpack.c.b16 %v1356, %v1356
      %v1389 = vpack.c.b16 %v1357, %v1357
      %v1390 = vpack.c.b16 %v1358, %v1358
      %v1391 = vpack.c.b16 %v1359, %v1359
      %v1392 = vpack.c.b16 %v1360, %v1360
      %v1393 = vpack.c.b16 %v1361, %v1361
      %v1394 = vpack.c.b16 %v1362, %v1362
      %v1395 = vpack.c.b16 %v1363, %v1363
      %v1396 = vpack.c.b16 %v1364, %v1364
      %v1397 = vpack.c.b16 %v1365, %v1365
      %v1398 = vpack.c.b16 %v1366, %v1366
      %v1399 = vpack.c.b16 %v1367, %v1367
      %v1400 = vpack.c.b16 %v1368, %v1368
      %v1401 = vpack.c.b16 %v1369, %v1369
      %vm1434 = vcmask 257024
      %1435 = vst.msk [vmem:[%s302] sm:$0xf] %vm1434, %v1370
      %1436 = vst.msk [vmem:[%s302 + $0x4] sm:$0xf] %vm1434, %v1371
      %1437 = vst.msk [vmem:[%s302 + $0x8] sm:$0xf] %vm1434, %v1372
      %1438 = vst.msk [vmem:[%s302 + $0xc] sm:$0xf] %vm1434, %v1373
      %1439 = vst.msk [vmem:[%s302 + $0x10] sm:$0xf] %vm1434, %v1374
      %1440 = vst.msk [vmem:[%s302 + $0x14] sm:$0xf] %vm1434, %v1375
      %1441 = vst.msk [vmem:[%s302 + $0x18] sm:$0xf] %vm1434, %v1376
      %1442 = vst.msk [vmem:[%s302 + $0x1c] sm:$0xf] %vm1434, %v1377
      %1443 = vst.msk [vmem:[%s302 + $0x20] sm:$0xf] %vm1434, %v1378
      %1444 = vst.msk [vmem:[%s302 + $0x24] sm:$0xf] %vm1434, %v1379
      %1445 = vst.msk [vmem:[%s302 + $0x28] sm:$0xf] %vm1434, %v1380
      %1446 = vst.msk [vmem:[%s302 + $0x2c] sm:$0xf] %vm1434, %v1381
      %1447 = vst.msk [vmem:[%s302 + $0x30] sm:$0xf] %vm1434, %v1382
      %1448 = vst.msk [vmem:[%s302 + $0x34] sm:$0xf] %vm1434, %v1383
      %1449 = vst.msk [vmem:[%s302 + $0x38] sm:$0xf] %vm1434, %v1384
      %1450 = vst.msk [vmem:[%s302 + $0x3c] sm:$0xf] %vm1434, %v1385
      %1451 = vst.msk [vmem:[%s302 + $0x40] sm:$0xf] %vm1434, %v1386
      %1452 = vst.msk [vmem:[%s302 + $0x44] sm:$0xf] %vm1434, %v1387
      %1453 = vst.msk [vmem:[%s302 + $0x48] sm:$0xf] %vm1434, %v1388
      %1454 = vst.msk [vmem:[%s302 + $0x4c] sm:$0xf] %vm1434, %v1389
      %1455 = vst.msk [vmem:[%s302 + $0x50] sm:$0xf] %vm1434, %v1390
      %1456 = vst.msk [vmem:[%s302 + $0x54] sm:$0xf] %vm1434, %v1391
      %1457 = vst.msk [vmem:[%s302 + $0x58] sm:$0xf] %vm1434, %v1392
      %1458 = vst.msk [vmem:[%s302 + $0x5c] sm:$0xf] %vm1434, %v1393
      %1459 = vst.msk [vmem:[%s302 + $0x60] sm:$0xf] %vm1434, %v1394
      %1460 = vst.msk [vmem:[%s302 + $0x64] sm:$0xf] %vm1434, %v1395
      %1461 = vst.msk [vmem:[%s302 + $0x68] sm:$0xf] %vm1434, %v1396
      %1462 = vst.msk [vmem:[%s302 + $0x6c] sm:$0xf] %vm1434, %v1397
      %1463 = vst.msk [vmem:[%s302 + $0x70] sm:$0xf] %vm1434, %v1398
      %1464 = vst.msk [vmem:[%s302 + $0x74] sm:$0xf] %vm1434, %v1399
      %1465 = vst.msk [vmem:[%s302 + $0x78] sm:$0xf] %vm1434, %v1400
      %1466 = vst.msk [vmem:[%s302 + $0x7c] sm:$0xf] %vm1434, %v1401
      %s1467 = smul.u32 32, %s18
      %p1468 = scmp.lt.s32.totalorder %s1467, 63
      %s1469 = scalar_select %p1468, %s1467, 63
      %s1470 = smul.addr %s1469, 4
      %s1471 = scalar_lea.vmem %s7, %s1470
      // Predicated region
      $region49: #{tpu_custom_call.1} parent=47 // pred_check
        %p1472 = pneg %p193
      $region50: #{tpu_custom_call.1} parent=47 // pred_check_branch
        %1474 = sbr.rel (%p1472) target = $region52
      $region51: #{tpu_custom_call.1} parent=47 // pred_region
        %s1475 = smul.u32 32, %s18
      $region52: #{tpu_custom_call.1} parent=47 // pred_fallthru
        _
    $region48: #{tpu_custom_call.1} parent=5 // pred_fallthru
      _
    %p1476 = scmp.le.s32.totalorder 2, %s13
    // Predicated region
    $region53: #{tpu_custom_call.1} parent=5 // pred_check
      %p1477 = pneg %p1476
    $region54: #{tpu_custom_call.1} parent=5 // pred_check_branch
      %1479 = sbr.rel (%p1477) target = $region56
    $region55: #{tpu_custom_call.1} parent=5 // pred_region
      %s1480 = ssub.s32 %s13, 2
      // Predicated region
      $region57: #{tpu_custom_call.1} parent=55 // pred_check
        %p1481 = pneg %p199
      $region58: #{tpu_custom_call.1} parent=55 // pred_check_branch
        %1483 = sbr.rel (%p1481) target = $region60
      $region59: #{tpu_custom_call.1} parent=55 // pred_region
        %s1484 = smul.u32 32, %s19
        %p1485 = scmp.lt.s32.totalorder %s1484, 63
        %s1486 = scalar_select %p1485, %s1484, 63
        %s1487 = smul.addr %s1486, 4
        %s1488 = scalar_lea.vmem %s7, %s1487
      $region60: #{tpu_custom_call.1} parent=55 // pred_fallthru
        _
    $region56: #{tpu_custom_call.1} parent=5 // pred_fallthru
      _
  $region6: #{tpu_custom_call.1} parent=0 // loop_footer
    %s17 = sadd.s32 1, %s13
  $region7: #{tpu_custom_call.1} parent=0 // loop_footer_branch
    %12 = sbr.rel target = $region3
  $region8: #{tpu_custom_call.1} parent=0 // loop_exit
    _

</llo_original>
